<compile_context>
chip_gen: v7x
topology: tpu7x:2x2x1
jax: 0.10.0
libtpu: 0.0.40
codegen_flags: <defaults>
</compile_context>

<pallas_src>
import functools

import jax
import jax.numpy as jnp
from jax.experimental import pallas as pl
from jax.experimental.pallas import tpu as pltpu


def _round_up(n, m):
    return ((n + m - 1) // m) * m


def _cdiv(a, b):
    return -(-a // b)


def _mlp_kernel(x_ref,
                w1_ref, b1_ref,
                w2_ref, b2_ref,
                w3_ref, b3_ref,
                w4d_ref, b4d_ref,
                out_ref):
    """Fused 4-layer MLP + 2-class softmax on one packed batch tile.

    x_ref   : (TBP, PACK*input_size)  -- PACK original rows per packed row
    wN_ref  : block-diagonal packed weights (resident in VMEM)
    out_ref : (TBP, PACK) of p1 = softmax(logits)[:, 1]
    """
    x = x_ref[...]

    h = jnp.dot(x, w1_ref[...], preferred_element_type=jnp.float32) + b1_ref[...]
    h = jnp.maximum(h, 0.0)
    h = jnp.dot(h, w2_ref[...], preferred_element_type=jnp.float32) + b2_ref[...]
    h = jnp.maximum(h, 0.0)
    h = jnp.dot(h, w3_ref[...], preferred_element_type=jnp.float32) + b3_ref[...]
    h = jnp.maximum(h, 0.0)
    # fc4 folded to the logit difference d = z1 - z0 (one lane per original row).
    d = jnp.dot(h, w4d_ref[...], preferred_element_type=jnp.float32) + b4d_ref[...]
    # Exact 2-class softmax via sigmoid identity: p1 = 1 / (1 + exp(-d)).
    # exp -> EUP; exact divide (approx reciprocal was not accurate enough).
    out_ref[...] = (1.0 / (1.0 + jnp.exp(-d))).astype(out_ref.dtype)


def _pack_params(params, pack):
    """Block-diagonal weights so `pack` batch rows share one MXU contraction."""
    eye = jnp.eye(pack, dtype=jnp.float32)
    packed = []
    for i in (1, 2, 3):
        packed.append(jnp.kron(eye, params[f"w{i}"]))          # (pack*in, pack*out)
        packed.append(jnp.tile(params[f"b{i}"], (1, pack)))     # (1, pack*out)
    # fc4 folded to the two-logit difference.
    w4d = (params["w4"][:, 1] - params["w4"][:, 0]).reshape(-1, 1)   # (8, 1)
    b4d = params["b4"][0, 1] - params["b4"][0, 0]
    packed.append(jnp.kron(eye, w4d))                           # (pack*8, pack)
    packed.append(jnp.full((1, pack), b4d, jnp.float32))        # (1, pack)
    return tuple(packed)


@functools.partial(jax.jit, static_argnames=("pack", "block_rows"))
def price_prediction_forward(x, params, *, pack=8, block_rows=16384):
    """Forward pass.

    x: (B, input_size) float32
    params: dict with w1..w4 stored (in, out) and b1..b4 stored (1, out)
    pack: batch rows folded into the contraction dim (8 fills a 128-wide MXU
          at input_size=16; 16 suits v6e/v7x's 256-wide MXU).
    block_rows: max original batch rows per grid step.
    """
    b, feat = x.shape
    p = pack

    # --- tiling of the packed batch axis ------------------------------------
    bp = _cdiv(b, p)                                   # packed rows needed
    tbp = max(8, min(_round_up(bp, 8),
                     _round_up(max(block_rows // p, 8), 8)))
    # VMEM cap: 4096 packed rows keeps (2x-buffered input + f32 intermediates
    # + output) ~12 MiB -> inside v5e's 16 MiB default scoped VMEM, far inside
    # v6e's 128 MiB and v7x's 64 MiB.
    tbp = min(tbp, 4096)
    # If the whole batch fits in one grid step, split it in two so both v7x
    # TensorCores get work (no-op for batches that fit a single 8-row tile).
    if bp > 8 and _cdiv(bp, tbp) == 1:
        tbp = _round_up(_cdiv(bp, 2), 8)
    bp_pad = _round_up(bp, tbp)
    rows_pad = bp_pad * p

    # Zero-padded rows flow through the MLP and are sliced off below
    # (softmax is per-row, so padding is numerically inert).
    if rows_pad != b:
        x = jnp.pad(x, ((0, rows_pad - b), (0, 0)))
    x_packed = x.reshape(bp_pad, p * feat)             # free, contiguous reshape

    weights = _pack_params(params, p)

    grid = (bp_pad // tbp,)
    # x / p1 stream through the grid; packed weights + biases stay resident in
    # VMEM (constant index_map -> same block every step, no re-DMA).
    x_spec = pl.BlockSpec((tbp, p * feat), lambda i: (i, 0))
    weight_specs = [pl.BlockSpec(w.shape, lambda i: (0, 0)) for w in weights]
    out_spec = pl.BlockSpec((tbp, p), lambda i: (i, 0))

    p1 = pl.pallas_call(
        _mlp_kernel,
        out_shape=jax.ShapeDtypeStruct((bp_pad, p), jnp.float32),
        grid=grid,
        in_specs=[x_spec] + weight_specs,
        out_specs=out_spec,
        compiler_params=pltpu.CompilerParams(
            dimension_semantics=("parallel",)),        # megacore split on v7x
    )(x_packed, *weights)

    # Unpack: packed row r lane j == original row r*p + j.
    p1 = p1.reshape(rows_pad, 1)[:b]
    return jnp.concatenate([1.0 - p1, p1], axis=-1)


def init_params(key, input_size):
    """Deterministic init mimicking PyTorch nn.Linear default (U(+-1/sqrt(fan_in)))."""
    dims = [(input_size, 32), (32, 16), (16, 8), (8, 2)]
    params = {}
    for i, (fan_in, fan_out) in enumerate(dims, start=1):
        key, kw, kb = jax.random.split(key, 3)
        bound = 1.0 / jnp.sqrt(jnp.float32(fan_in))
        # weights stored as (in, out): kernel computes x @ W + b (== x @ W_pt.T + b).
        params[f"w{i}"] = jax.random.uniform(
            kw, (fan_in, fan_out), jnp.float32, minval=-bound, maxval=bound)
        params[f"b{i}"] = jax.random.uniform(
            kb, (1, fan_out), jnp.float32, minval=-bound, maxval=bound)
    return params


def _reference_forward(x, params):
    """Pure-JAX reference for correctness checking."""
    h = jnp.maximum(x @ params["w1"] + params["b1"], 0.0)
    h = jnp.maximum(h @ params["w2"] + params["b2"], 0.0)
    h = jnp.maximum(h @ params["w3"] + params["b3"], 0.0)
    logits = h @ params["w4"] + params["b4"]
    return jax.nn.softmax(logits, axis=1)


if __name__ == "__main__":
    key = jax.random.PRNGKey(0)
    key, kx, kp, kx2 = jax.random.split(key, 4)

    batch = 8
    input_size = 16  # number of tabular price features

    x = jax.random.normal(kx, (batch, input_size), jnp.float32)
    params = init_params(kp, input_size)

    # Small-batch path (single grid step).
    out = jax.block_until_ready(price_prediction_forward(x, params))
    assert out.shape == (batch, 2)
    assert jnp.allclose(jnp.sum(out, axis=1), 1.0, atol=1e-5)
    ref = _reference_forward(x, params)
    assert jnp.allclose(out, ref, atol=1e-5), "mismatch vs reference softmax MLP"

    # Large-batch path: exercises the multi-step grid + resident packed weights.
    x2 = jax.random.normal(kx2, (65536, input_size), jnp.float32)
    out2 = jax.block_until_ready(price_prediction_forward(x2, params))
    assert out2.shape == (65536, 2)
    assert jnp.allclose(jnp.sum(out2, axis=1), 1.0, atol=1e-5)
    ref2 = _reference_forward(x2, params)
    assert jnp.allclose(out2, ref2, atol=1e-5)

    print("KERNEL_OK")
</pallas_src>

<mosaic_0001>
module attributes {stable_mosaic.version = 11 : i64} {
  func.func @_mlp_kernel(%arg0: i32, %arg1: memref<8x128xf32, #tpu.memory_space<vmem>>, %arg2: memref<128x256xf32, #tpu.memory_space<vmem>>, %arg3: memref<1x256xf32, #tpu.memory_space<vmem>>, %arg4: memref<256x128xf32, #tpu.memory_space<vmem>>, %arg5: memref<1x128xf32, #tpu.memory_space<vmem>>, %arg6: memref<128x64xf32, #tpu.memory_space<vmem>>, %arg7: memref<1x64xf32, #tpu.memory_space<vmem>>, %arg8: memref<64x8xf32, #tpu.memory_space<vmem>>, %arg9: memref<1x8xf32, #tpu.memory_space<vmem>>, %arg10: memref<8x8xf32, #tpu.memory_space<vmem>>) attributes {dimension_semantics = [#tpu.dimension_semantics<parallel>], iteration_bounds = array<i64: 1>, scalar_prefetch = 0 : i64, scratch_operands = 0 : i64, tpu.core_type = #tpu.core_type<tc>, window_params = [{transform_indices = @transform_0, window_bounds = array<i64: 8, 128>}, {pipeline_mode = #tpu.pipeline_mode<synchronous>, transform_indices = @transform_1, window_bounds = array<i64: 128, 256>}, {pipeline_mode = #tpu.pipeline_mode<synchronous>, transform_indices = @transform_2, window_bounds = array<i64: 1, 256>}, {pipeline_mode = #tpu.pipeline_mode<synchronous>, transform_indices = @transform_3, window_bounds = array<i64: 256, 128>}, {pipeline_mode = #tpu.pipeline_mode<synchronous>, transform_indices = @transform_4, window_bounds = array<i64: 1, 128>}, {pipeline_mode = #tpu.pipeline_mode<synchronous>, transform_indices = @transform_5, window_bounds = array<i64: 128, 64>}, {pipeline_mode = #tpu.pipeline_mode<synchronous>, transform_indices = @transform_6, window_bounds = array<i64: 1, 64>}, {pipeline_mode = #tpu.pipeline_mode<synchronous>, transform_indices = @transform_7, window_bounds = array<i64: 64, 8>}, {pipeline_mode = #tpu.pipeline_mode<synchronous>, transform_indices = @transform_8, window_bounds = array<i64: 1, 8>}, {transform_indices = @transform_9, window_bounds = array<i64: 8, 8>}]} {
    %c0 = arith.constant 0 : index
    %c0_0 = arith.constant 0 : index
    %0 = vector.load %arg1[%c0, %c0_0] : memref<8x128xf32, #tpu.memory_space<vmem>>, vector<8x128xf32>
    %c0_1 = arith.constant 0 : index
    %c0_2 = arith.constant 0 : index
    %1 = vector.load %arg2[%c0_1, %c0_2] : memref<128x256xf32, #tpu.memory_space<vmem>>, vector<128x256xf32>
    %cst = arith.constant dense<0.000000e+00> : vector<8x256xf32>
    %2 = tpu.matmul %0, %1, %cst {dimension_numbers = #tpu.dot_dimension_numbers<[1], [0], [0], [1], [0, 0, 1, 1], [], []>} : vector<8x128xf32>, vector<128x256xf32>, vector<8x256xf32> -> vector<8x256xf32>
    %c0_3 = arith.constant 0 : index
    %c0_4 = arith.constant 0 : index
    %3 = vector.load %arg3[%c0_3, %c0_4] : memref<1x256xf32, #tpu.memory_space<vmem>>, vector<1x256xf32>
    %4 = vector.broadcast %3 : vector<1x256xf32> to vector<8x256xf32>
    %5 = arith.addf %2, %4 : vector<8x256xf32>
    %cst_5 = arith.constant 0.000000e+00 : f32
    %6 = vector.broadcast %cst_5 : f32 to vector<8x256xf32>
    %7 = arith.maximumf %5, %6 : vector<8x256xf32>
    %c0_6 = arith.constant 0 : index
    %c0_7 = arith.constant 0 : index
    %8 = vector.load %arg4[%c0_6, %c0_7] : memref<256x128xf32, #tpu.memory_space<vmem>>, vector<256x128xf32>
    %cst_8 = arith.constant dense<0.000000e+00> : vector<8x128xf32>
    %9 = tpu.matmul %7, %8, %cst_8 {dimension_numbers = #tpu.dot_dimension_numbers<[1], [0], [0], [1], [0, 0, 1, 1], [], []>} : vector<8x256xf32>, vector<256x128xf32>, vector<8x128xf32> -> vector<8x128xf32>
    %c0_9 = arith.constant 0 : index
    %c0_10 = arith.constant 0 : index
    %10 = vector.load %arg5[%c0_9, %c0_10] : memref<1x128xf32, #tpu.memory_space<vmem>>, vector<1x128xf32>
    %11 = vector.broadcast %10 : vector<1x128xf32> to vector<8x128xf32>
    %12 = arith.addf %9, %11 : vector<8x128xf32>
    %cst_11 = arith.constant 0.000000e+00 : f32
    %13 = vector.broadcast %cst_11 : f32 to vector<8x128xf32>
    %14 = arith.maximumf %12, %13 : vector<8x128xf32>
    %c0_12 = arith.constant 0 : index
    %c0_13 = arith.constant 0 : index
    %15 = vector.load %arg6[%c0_12, %c0_13] : memref<128x64xf32, #tpu.memory_space<vmem>>, vector<128x64xf32>
    %cst_14 = arith.constant dense<0.000000e+00> : vector<8x64xf32>
    %16 = tpu.matmul %14, %15, %cst_14 {dimension_numbers = #tpu.dot_dimension_numbers<[1], [0], [0], [1], [0, 0, 1, 1], [], []>} : vector<8x128xf32>, vector<128x64xf32>, vector<8x64xf32> -> vector<8x64xf32>
    %c0_15 = arith.constant 0 : index
    %c0_16 = arith.constant 0 : index
    %17 = vector.load %arg7[%c0_15, %c0_16] : memref<1x64xf32, #tpu.memory_space<vmem>>, vector<1x64xf32>
    %18 = vector.broadcast %17 : vector<1x64xf32> to vector<8x64xf32>
    %19 = arith.addf %16, %18 : vector<8x64xf32>
    %cst_17 = arith.constant 0.000000e+00 : f32
    %20 = vector.broadcast %cst_17 : f32 to vector<8x64xf32>
    %21 = arith.maximumf %19, %20 : vector<8x64xf32>
    %c0_18 = arith.constant 0 : index
    %c0_19 = arith.constant 0 : index
    %22 = vector.load %arg8[%c0_18, %c0_19] : memref<64x8xf32, #tpu.memory_space<vmem>>, vector<64x8xf32>
    %cst_20 = arith.constant dense<0.000000e+00> : vector<8x8xf32>
    %23 = tpu.matmul %21, %22, %cst_20 {dimension_numbers = #tpu.dot_dimension_numbers<[1], [0], [0], [1], [0, 0, 1, 1], [], []>} : vector<8x64xf32>, vector<64x8xf32>, vector<8x8xf32> -> vector<8x8xf32>
    %c0_21 = arith.constant 0 : index
    %c0_22 = arith.constant 0 : index
    %24 = vector.load %arg9[%c0_21, %c0_22] : memref<1x8xf32, #tpu.memory_space<vmem>>, vector<1x8xf32>
    %25 = vector.broadcast %24 : vector<1x8xf32> to vector<8x8xf32>
    %26 = arith.addf %23, %25 : vector<8x8xf32>
    %cst_23 = arith.constant 0.000000e+00 : f32
    %27 = vector.broadcast %cst_23 : f32 to vector<8x8xf32>
    %28 = arith.subf %27, %26 : vector<8x8xf32>
    %29 = math.exp %28 : vector<8x8xf32>
    %cst_24 = arith.constant 1.000000e+00 : f32
    %30 = vector.broadcast %cst_24 : f32 to vector<8x8xf32>
    %31 = arith.addf %30, %29 : vector<8x8xf32>
    %cst_25 = arith.constant 1.000000e+00 : f32
    %32 = vector.broadcast %cst_25 : f32 to vector<8x8xf32>
    %33 = arith.divf %32, %31 : vector<8x8xf32>
    %c0_26 = arith.constant 0 : index
    %c0_27 = arith.constant 0 : index
    %34 = vector.load %arg10[%c0_26, %c0_27] : memref<8x8xf32, #tpu.memory_space<vmem>>, vector<8x8xf32>
    tpu.vector_store %arg10[%c0_26, %c0_27], %33 {strides = array<i32>} : memref<8x8xf32, #tpu.memory_space<vmem>>, vector<8x8xf32>,
    return
  }
  func.func @transform_0(%arg0: i32) -> (i32, i32) {
    %c0_i32 = arith.constant 0 : i32
    %c0_i32_0 = arith.constant 0 : i32
    return %arg0, %c0_i32 : i32, i32
  }
  func.func @transform_1(%arg0: i32) -> (i32, i32) {
    %c0_i32 = arith.constant 0 : i32
    %c0_i32_0 = arith.constant 0 : i32
    %c0_i32_1 = arith.constant 0 : i32
    return %c0_i32, %c0_i32_0 : i32, i32
  }
  func.func @transform_2(%arg0: i32) -> (i32, i32) {
    %c0_i32 = arith.constant 0 : i32
    %c0_i32_0 = arith.constant 0 : i32
    %c0_i32_1 = arith.constant 0 : i32
    return %c0_i32, %c0_i32_0 : i32, i32
  }
  func.func @transform_3(%arg0: i32) -> (i32, i32) {
    %c0_i32 = arith.constant 0 : i32
    %c0_i32_0 = arith.constant 0 : i32
    %c0_i32_1 = arith.constant 0 : i32
    return %c0_i32, %c0_i32_0 : i32, i32
  }
  func.func @transform_4(%arg0: i32) -> (i32, i32) {
    %c0_i32 = arith.constant 0 : i32
    %c0_i32_0 = arith.constant 0 : i32
    %c0_i32_1 = arith.constant 0 : i32
    return %c0_i32, %c0_i32_0 : i32, i32
  }
  func.func @transform_5(%arg0: i32) -> (i32, i32) {
    %c0_i32 = arith.constant 0 : i32
    %c0_i32_0 = arith.constant 0 : i32
    %c0_i32_1 = arith.constant 0 : i32
    return %c0_i32, %c0_i32_0 : i32, i32
  }
  func.func @transform_6(%arg0: i32) -> (i32, i32) {
    %c0_i32 = arith.constant 0 : i32
    %c0_i32_0 = arith.constant 0 : i32
    %c0_i32_1 = arith.constant 0 : i32
    return %c0_i32, %c0_i32_0 : i32, i32
  }
  func.func @transform_7(%arg0: i32) -> (i32, i32) {
    %c0_i32 = arith.constant 0 : i32
    %c0_i32_0 = arith.constant 0 : i32
    %c0_i32_1 = arith.constant 0 : i32
    return %c0_i32, %c0_i32_0 : i32, i32
  }
  func.func @transform_8(%arg0: i32) -> (i32, i32) {
    %c0_i32 = arith.constant 0 : i32
    %c0_i32_0 = arith.constant 0 : i32
    %c0_i32_1 = arith.constant 0 : i32
    return %c0_i32, %c0_i32_0 : i32, i32
  }
  func.func @transform_9(%arg0: i32) -> (i32, i32) {
    %c0_i32 = arith.constant 0 : i32
    %c0_i32_0 = arith.constant 0 : i32
    return %arg0, %c0_i32 : i32, i32
  }
}

</mosaic_0001>

<llo_original>
// kernel: price_prediction_forward.1
$region0: #{price_prediction_forward.1}
  #allocation0 [shape = 'u32[]', space=smem, size = 0x4, offset = 0x4, fixed_abs, tag = 'smem constant byte address 0x4 - core index']
  #allocation1 [shape = 'u32[144,128]{1,0:T(1,128)}', space=vmem, size = 0x12000, scoped, tag = 'internal scratch']
  %s0 = inlined_call_operand.vmem [shape: f32[8,128], index: 0, kind: input, shape index: {}]
  %s1 = inlined_call_operand.vmem [shape: f32[128,256], index: 1, kind: input, shape index: {}]
  %s2 = inlined_call_operand.vmem [shape: f32[1,256], index: 2, kind: input, shape index: {}]
  %s3 = inlined_call_operand.vmem [shape: f32[256,128], index: 3, kind: input, shape index: {}]
  %s4 = inlined_call_operand.vmem [shape: f32[1,128], index: 4, kind: input, shape index: {}]
  %s5 = inlined_call_operand.vmem [shape: f32[128,64], index: 5, kind: input, shape index: {}]
  %s6 = inlined_call_operand.vmem [shape: f32[1,64], index: 6, kind: input, shape index: {}]
  %s7 = inlined_call_operand.vmem [shape: f32[64,8], index: 7, kind: input, shape index: {}]
  %s8 = inlined_call_operand.vmem [shape: f32[1,8], index: 8, kind: input, shape index: {}]
  %s9 = inlined_call_operand.vmem [shape: f32[8,8], index: 9, kind: output, shape index: {}]
  %s10 = sld [smem:[#allocation0]]
  $region46: #{price_prediction_forward.1} parent=0
    _
  %s12 = ssub.s32 1, %s10
  %s13 = scalar_select 0, %s12, %s10
  // Predicated region
  $region2: #{price_prediction_forward.1} parent=0 // pred_check
    _
  $region3: #{price_prediction_forward.1} parent=0 // pred_check_branch
    %15 = sbr.rel (0) target = $region5
  $region4: #{price_prediction_forward.1} parent=0 // pred_region
    _
  $region5: #{price_prediction_forward.1} parent=0 // pred_fallthru
    _
  // Predicated region
  $region6: #{price_prediction_forward.1} parent=0 // pred_check
    _
  $region7: #{price_prediction_forward.1} parent=0 // pred_check_branch
    %17 = sbr.rel (0) target = $region9
  $region8: #{price_prediction_forward.1} parent=0 // pred_region
    _
  $region9: #{price_prediction_forward.1} parent=0 // pred_fallthru
    _
  // Predicated region
  $region10: #{price_prediction_forward.1} parent=0 // pred_check
    _
  $region11: #{price_prediction_forward.1} parent=0 // pred_check_branch
    %19 = sbr.rel (0) target = $region13
  $region12: #{price_prediction_forward.1} parent=0 // pred_region
    _
  $region13: #{price_prediction_forward.1} parent=0 // pred_fallthru
    _
  // Predicated region
  $region14: #{price_prediction_forward.1} parent=0 // pred_check
    _
  $region15: #{price_prediction_forward.1} parent=0 // pred_check_branch
    %21 = sbr.rel (0) target = $region17
  $region16: #{price_prediction_forward.1} parent=0 // pred_region
    _
  $region17: #{price_prediction_forward.1} parent=0 // pred_fallthru
    _
  // Predicated region
  $region18: #{price_prediction_forward.1} parent=0 // pred_check
    _
  $region19: #{price_prediction_forward.1} parent=0 // pred_check_branch
    %23 = sbr.rel (0) target = $region21
  $region20: #{price_prediction_forward.1} parent=0 // pred_region
    _
  $region21: #{price_prediction_forward.1} parent=0 // pred_fallthru
    _
  // Predicated region
  $region22: #{price_prediction_forward.1} parent=0 // pred_check
    _
  $region23: #{price_prediction_forward.1} parent=0 // pred_check_branch
    %25 = sbr.rel (0) target = $region25
  $region24: #{price_prediction_forward.1} parent=0 // pred_region
    _
  $region25: #{price_prediction_forward.1} parent=0 // pred_fallthru
    _
  // Predicated region
  $region26: #{price_prediction_forward.1} parent=0 // pred_check
    _
  $region27: #{price_prediction_forward.1} parent=0 // pred_check_branch
    %27 = sbr.rel (0) target = $region29
  $region28: #{price_prediction_forward.1} parent=0 // pred_region
    _
  $region29: #{price_prediction_forward.1} parent=0 // pred_fallthru
    _
  // Predicated region
  $region30: #{price_prediction_forward.1} parent=0 // pred_check
    _
  $region31: #{price_prediction_forward.1} parent=0 // pred_check_branch
    %29 = sbr.rel (0) target = $region33
  $region32: #{price_prediction_forward.1} parent=0 // pred_region
    _
  $region33: #{price_prediction_forward.1} parent=0 // pred_fallthru
    _
  // Predicated region
  $region34: #{price_prediction_forward.1} parent=0 // pred_check
    _
  $region35: #{price_prediction_forward.1} parent=0 // pred_check_branch
    %31 = sbr.rel (0) target = $region37
  $region36: #{price_prediction_forward.1} parent=0 // pred_region
    _
  $region37: #{price_prediction_forward.1} parent=0 // pred_fallthru
    _
  %v32 = vld [vmem:[%s0] sm:$0xff]
  %v33 = vld [vmem:[%s1] sm:$0xff]
  %v34 = vld [vmem:[%s1 + $0x8] sm:$0xff]
  %v35 = vld [vmem:[%s1 + $0x10] sm:$0xff]
  %v36 = vld [vmem:[%s1 + $0x18] sm:$0xff]
  %v37 = vld [vmem:[%s1 + $0x20] sm:$0xff]
  %v38 = vld [vmem:[%s1 + $0x28] sm:$0xff]
  %v39 = vld [vmem:[%s1 + $0x30] sm:$0xff]
  %v40 = vld [vmem:[%s1 + $0x38] sm:$0xff]
  %v41 = vld [vmem:[%s1 + $0x40] sm:$0xff]
  %v42 = vld [vmem:[%s1 + $0x48] sm:$0xff]
  %v43 = vld [vmem:[%s1 + $0x50] sm:$0xff]
  %v44 = vld [vmem:[%s1 + $0x58] sm:$0xff]
  %v45 = vld [vmem:[%s1 + $0x60] sm:$0xff]
  %v46 = vld [vmem:[%s1 + $0x68] sm:$0xff]
  %v47 = vld [vmem:[%s1 + $0x70] sm:$0xff]
  %v48 = vld [vmem:[%s1 + $0x78] sm:$0xff]
  %v49 = vld [vmem:[%s1 + $0x80] sm:$0xff]
  %v50 = vld [vmem:[%s1 + $0x88] sm:$0xff]
  %v51 = vld [vmem:[%s1 + $0x90] sm:$0xff]
  %v52 = vld [vmem:[%s1 + $0x98] sm:$0xff]
  %v53 = vld [vmem:[%s1 + $0xa0] sm:$0xff]
  %v54 = vld [vmem:[%s1 + $0xa8] sm:$0xff]
  %v55 = vld [vmem:[%s1 + $0xb0] sm:$0xff]
  %v56 = vld [vmem:[%s1 + $0xb8] sm:$0xff]
  %v57 = vld [vmem:[%s1 + $0xc0] sm:$0xff]
  %v58 = vld [vmem:[%s1 + $0xc8] sm:$0xff]
  %v59 = vld [vmem:[%s1 + $0xd0] sm:$0xff]
  %v60 = vld [vmem:[%s1 + $0xd8] sm:$0xff]
  %v61 = vld [vmem:[%s1 + $0xe0] sm:$0xff]
  %v62 = vld [vmem:[%s1 + $0xe8] sm:$0xff]
  %v63 = vld [vmem:[%s1 + $0xf0] sm:$0xff]
  %v64 = vld [vmem:[%s1 + $0xf8] sm:$0xff]
  %v65 = vld [vmem:[%s2] sm:$0x3]
  %v67 = vlaneseq
  %v68 = vshrl.u32 %v67, 7
  %v69 = vsub.s32 0, %v68
  %v70 = vrot.slane %v65, %v69
  %v71 = vlaneseq
  %v72 = vshrl.u32 %v71, 7
  %v73 = vsub.s32 1, %v72
  %v74 = vrot.slane %v65, %v73
  %77 = vmatprep.subr.mxu0 %v34
  %78 = vmatpush1.msra.mxu0 %v33
  %79 = vmatprep.subr.mxu0 %v36
  %80 = vmatpush1.msra.mxu0 %v35
  %81 = vmatprep.subr.mxu0 %v38
  %82 = vmatpush1.msra.mxu0 %v37
  %83 = vmatprep.subr.mxu0 %v40
  %84 = vmatpush1.msra.mxu0 %v39
  %85 = vmatprep.subr.mxu0 %v42
  %86 = vmatpush1.msra.mxu0 %v41
  %87 = vmatprep.subr.mxu0 %v44
  %88 = vmatpush1.msra.mxu0 %v43
  %89 = vmatprep.subr.mxu0 %v46
  %90 = vmatpush1.msra.mxu0 %v45
  %91 = vmatprep.subr.mxu0 %v48
  %92 = vmatpush1.msra.mxu0 %v47
  %93 = vmatprep.subr.mxu0 %v50
  %94 = vmatpush1.msra.mxu0 %v49
  %95 = vmatprep.subr.mxu0 %v52
  %96 = vmatpush1.msra.mxu0 %v51
  %97 = vmatprep.subr.mxu0 %v54
  %98 = vmatpush1.msra.mxu0 %v53
  %99 = vmatprep.subr.mxu0 %v56
  %100 = vmatpush1.msra.mxu0 %v55
  %101 = vmatprep.subr.mxu0 %v58
  %102 = vmatpush1.msra.mxu0 %v57
  %103 = vmatprep.subr.mxu0 %v60
  %104 = vmatpush1.msra.mxu0 %v59
  %105 = vmatprep.subr.mxu0 %v62
  %106 = vmatpush1.msra.mxu0 %v61
  %107 = vmatprep.subr.mxu0 %v64
  %108 = vmatpush1.msra.mxu0 %v63
  %109 = vmatprep.subr.mxu0 0.0
  %110 = vmatpush1.msra.mxu0 0.0
  %111 = vmatprep.subr.mxu0 0.0
  %112 = vmatpush1.msra.mxu0 0.0
  %113 = vmatprep.subr.mxu0 0.0
  %114 = vmatpush1.msra.mxu0 0.0
  %115 = vmatprep.subr.mxu0 0.0
  %116 = vmatpush1.msra.mxu0 0.0
  %117 = vmatprep.subr.mxu0 0.0
  %118 = vmatpush1.msra.mxu0 0.0
  %119 = vmatprep.subr.mxu0 0.0
  %120 = vmatpush1.msra.mxu0 0.0
  %121 = vmatprep.subr.mxu0 0.0
  %122 = vmatpush1.msra.mxu0 0.0
  %123 = vmatprep.subr.mxu0 0.0
  %124 = vmatpush1.msra.mxu0 0.0
  %125 = vmatprep.subr.mxu0 0.0
  %126 = vmatpush1.msra.mxu0 0.0
  %127 = vmatprep.subr.mxu0 0.0
  %128 = vmatpush1.msra.mxu0 0.0
  %129 = vmatprep.subr.mxu0 0.0
  %130 = vmatpush1.msra.mxu0 0.0
  %131 = vmatprep.subr.mxu0 0.0
  %132 = vmatpush1.msra.mxu0 0.0
  %133 = vmatprep.subr.mxu0 0.0
  %134 = vmatpush1.msra.mxu0 0.0
  %135 = vmatprep.subr.mxu0 0.0
  %136 = vmatpush1.msra.mxu0 0.0
  %137 = vmatprep.subr.mxu0 0.0
  %138 = vmatpush1.msra.mxu0 0.0
  %139 = vmatprep.subr.mxu0 0.0
  %140 = vmatpush1.msra.mxu0 0.0
  %141 = vmatprep.mubr.f32.mxu0 0.0
  %142 = vmatmul.mubr.f32.gmra.mrb[0].mxu0 %v32
  %v143 = vpop.f32.mrb[0].mxu0
  %v144 = vadd.f32 %v70, %v143
  %v145 = vpop.f32.mrb[0].mxu0
  %v146 = vadd.f32 %v74, %v145
  %147 = vdwg.mxu0
  %v148 = vmax.f32 %v144, 0.0
  %v149 = vmax.f32 %v146, 0.0
  %v150 = vld [vmem:[%s3] sm:$0xff]
  %v151 = vld [vmem:[%s3 + $0x8] sm:$0xff]
  %v152 = vld [vmem:[%s3 + $0x10] sm:$0xff]
  %v153 = vld [vmem:[%s3 + $0x18] sm:$0xff]
  %v154 = vld [vmem:[%s3 + $0x20] sm:$0xff]
  %v155 = vld [vmem:[%s3 + $0x28] sm:$0xff]
  %v156 = vld [vmem:[%s3 + $0x30] sm:$0xff]
  %v157 = vld [vmem:[%s3 + $0x38] sm:$0xff]
  %v158 = vld [vmem:[%s3 + $0x40] sm:$0xff]
  %v159 = vld [vmem:[%s3 + $0x48] sm:$0xff]
  %v160 = vld [vmem:[%s3 + $0x50] sm:$0xff]
  %v161 = vld [vmem:[%s3 + $0x58] sm:$0xff]
  %v162 = vld [vmem:[%s3 + $0x60] sm:$0xff]
  %v163 = vld [vmem:[%s3 + $0x68] sm:$0xff]
  %v164 = vld [vmem:[%s3 + $0x70] sm:$0xff]
  %v165 = vld [vmem:[%s3 + $0x78] sm:$0xff]
  %v166 = vld [vmem:[%s3 + $0x80] sm:$0xff]
  %v167 = vld [vmem:[%s3 + $0x88] sm:$0xff]
  %v168 = vld [vmem:[%s3 + $0x90] sm:$0xff]
  %v169 = vld [vmem:[%s3 + $0x98] sm:$0xff]
  %v170 = vld [vmem:[%s3 + $0xa0] sm:$0xff]
  %v171 = vld [vmem:[%s3 + $0xa8] sm:$0xff]
  %v172 = vld [vmem:[%s3 + $0xb0] sm:$0xff]
  %v173 = vld [vmem:[%s3 + $0xb8] sm:$0xff]
  %v174 = vld [vmem:[%s3 + $0xc0] sm:$0xff]
  %v175 = vld [vmem:[%s3 + $0xc8] sm:$0xff]
  %v176 = vld [vmem:[%s3 + $0xd0] sm:$0xff]
  %v177 = vld [vmem:[%s3 + $0xd8] sm:$0xff]
  %v178 = vld [vmem:[%s3 + $0xe0] sm:$0xff]
  %v179 = vld [vmem:[%s3 + $0xe8] sm:$0xff]
  %v180 = vld [vmem:[%s3 + $0xf0] sm:$0xff]
  %v181 = vld [vmem:[%s3 + $0xf8] sm:$0xff]
  %v182 = vld [vmem:[%s4] sm:$0x1]
  %v184 = vlaneseq
  %v185 = vshrl.u32 %v184, 7
  %v186 = vsub.s32 0, %v185
  %v187 = vrot.slane %v182, %v186
  %189 = vmatprep.subr.mxu0 0.0
  %190 = vmatpush1.msra.mxu0 %v150
  %191 = vmatprep.subr.mxu0 0.0
  %192 = vmatpush1.msra.mxu0 %v151
  %193 = vmatprep.subr.mxu0 0.0
  %194 = vmatpush1.msra.mxu0 %v152
  %195 = vmatprep.subr.mxu0 0.0
  %196 = vmatpush1.msra.mxu0 %v153
  %197 = vmatprep.subr.mxu0 0.0
  %198 = vmatpush1.msra.mxu0 %v154
  %199 = vmatprep.subr.mxu0 0.0
  %200 = vmatpush1.msra.mxu0 %v155
  %201 = vmatprep.subr.mxu0 0.0
  %202 = vmatpush1.msra.mxu0 %v156
  %203 = vmatprep.subr.mxu0 0.0
  %204 = vmatpush1.msra.mxu0 %v157
  %205 = vmatprep.subr.mxu0 0.0
  %206 = vmatpush1.msra.mxu0 %v158
  %207 = vmatprep.subr.mxu0 0.0
  %208 = vmatpush1.msra.mxu0 %v159
  %209 = vmatprep.subr.mxu0 0.0
  %210 = vmatpush1.msra.mxu0 %v160
  %211 = vmatprep.subr.mxu0 0.0
  %212 = vmatpush1.msra.mxu0 %v161
  %213 = vmatprep.subr.mxu0 0.0
  %214 = vmatpush1.msra.mxu0 %v162
  %215 = vmatprep.subr.mxu0 0.0
  %216 = vmatpush1.msra.mxu0 %v163
  %217 = vmatprep.subr.mxu0 0.0
  %218 = vmatpush1.msra.mxu0 %v164
  %219 = vmatprep.subr.mxu0 0.0
  %220 = vmatpush1.msra.mxu0 %v165
  %221 = vmatprep.subr.mxu0 0.0
  %222 = vmatpush1.msra.mxu0 %v166
  %223 = vmatprep.subr.mxu0 0.0
  %224 = vmatpush1.msra.mxu0 %v167
  %225 = vmatprep.subr.mxu0 0.0
  %226 = vmatpush1.msra.mxu0 %v168
  %227 = vmatprep.subr.mxu0 0.0
  %228 = vmatpush1.msra.mxu0 %v169
  %229 = vmatprep.subr.mxu0 0.0
  %230 = vmatpush1.msra.mxu0 %v170
  %231 = vmatprep.subr.mxu0 0.0
  %232 = vmatpush1.msra.mxu0 %v171
  %233 = vmatprep.subr.mxu0 0.0
  %234 = vmatpush1.msra.mxu0 %v172
  %235 = vmatprep.subr.mxu0 0.0
  %236 = vmatpush1.msra.mxu0 %v173
  %237 = vmatprep.subr.mxu0 0.0
  %238 = vmatpush1.msra.mxu0 %v174
  %239 = vmatprep.subr.mxu0 0.0
  %240 = vmatpush1.msra.mxu0 %v175
  %241 = vmatprep.subr.mxu0 0.0
  %242 = vmatpush1.msra.mxu0 %v176
  %243 = vmatprep.subr.mxu0 0.0
  %244 = vmatpush1.msra.mxu0 %v177
  %245 = vmatprep.subr.mxu0 0.0
  %246 = vmatpush1.msra.mxu0 %v178
  %247 = vmatprep.subr.mxu0 0.0
  %248 = vmatpush1.msra.mxu0 %v179
  %249 = vmatprep.subr.mxu0 0.0
  %250 = vmatpush1.msra.mxu0 %v180
  %251 = vmatprep.subr.mxu0 0.0
  %252 = vmatpush1.msra.mxu0 %v181
  %253 = vmatprep.mubr.f32.mxu0 %v149
  %254 = vmatmul.mubr.f32.gmra.mrb[0].mxu0 %v148
  %v255 = vpop.f32.mrb[0].mxu0
  %v256 = vadd.f32 %v187, %v255
  %v257 = vpop.f32.mrb[0].mxu0
  %258 = vdwg.mxu0
  %v259 = vmax.f32 %v256, 0.0
  %v260 = vld [vmem:[%s5] sm:$0xff]
  %v261 = vld [vmem:[%s5 + $0x8] sm:$0xff]
  %v262 = vld [vmem:[%s5 + $0x10] sm:$0xff]
  %v263 = vld [vmem:[%s5 + $0x18] sm:$0xff]
  %v264 = vld [vmem:[%s5 + $0x20] sm:$0xff]
  %v265 = vld [vmem:[%s5 + $0x28] sm:$0xff]
  %v266 = vld [vmem:[%s5 + $0x30] sm:$0xff]
  %v267 = vld [vmem:[%s5 + $0x38] sm:$0xff]
  %v268 = vld [vmem:[%s5 + $0x40] sm:$0xff]
  %v269 = vld [vmem:[%s5 + $0x48] sm:$0xff]
  %v270 = vld [vmem:[%s5 + $0x50] sm:$0xff]
  %v271 = vld [vmem:[%s5 + $0x58] sm:$0xff]
  %v272 = vld [vmem:[%s5 + $0x60] sm:$0xff]
  %v273 = vld [vmem:[%s5 + $0x68] sm:$0xff]
  %v274 = vld [vmem:[%s5 + $0x70] sm:$0xff]
  %v275 = vld [vmem:[%s5 + $0x78] sm:$0xff]
  %v276 = vld [vmem:[%s6] sm:$0x1]
  %v278 = vlaneseq
  %v279 = vshrl.u32 %v278, 7
  %v280 = vsub.s32 0, %v279
  %v281 = vrot.slane %v276, %v280
  %283 = vmatprep.subr.mxu0 0.0
  %284 = vmatpush1.msra.mxu0 %v260
  %285 = vmatprep.subr.mxu0 0.0
  %286 = vmatpush1.msra.mxu0 %v261
  %287 = vmatprep.subr.mxu0 0.0
  %288 = vmatpush1.msra.mxu0 %v262
  %289 = vmatprep.subr.mxu0 0.0
  %290 = vmatpush1.msra.mxu0 %v263
  %291 = vmatprep.subr.mxu0 0.0
  %292 = vmatpush1.msra.mxu0 %v264
  %293 = vmatprep.subr.mxu0 0.0
  %294 = vmatpush1.msra.mxu0 %v265
  %295 = vmatprep.subr.mxu0 0.0
  %296 = vmatpush1.msra.mxu0 %v266
  %297 = vmatprep.subr.mxu0 0.0
  %298 = vmatpush1.msra.mxu0 %v267
  %299 = vmatprep.subr.mxu0 0.0
  %300 = vmatpush1.msra.mxu0 %v268
  %301 = vmatprep.subr.mxu0 0.0
  %302 = vmatpush1.msra.mxu0 %v269
  %303 = vmatprep.subr.mxu0 0.0
  %304 = vmatpush1.msra.mxu0 %v270
  %305 = vmatprep.subr.mxu0 0.0
  %306 = vmatpush1.msra.mxu0 %v271
  %307 = vmatprep.subr.mxu0 0.0
  %308 = vmatpush1.msra.mxu0 %v272
  %309 = vmatprep.subr.mxu0 0.0
  %310 = vmatpush1.msra.mxu0 %v273
  %311 = vmatprep.subr.mxu0 0.0
  %312 = vmatpush1.msra.mxu0 %v274
  %313 = vmatprep.subr.mxu0 0.0
  %314 = vmatpush1.msra.mxu0 %v275
  %315 = vmatprep.subr.mxu0 0.0
  %316 = vmatpush1.msra.mxu0 0.0
  %317 = vmatprep.subr.mxu0 0.0
  %318 = vmatpush1.msra.mxu0 0.0
  %319 = vmatprep.subr.mxu0 0.0
  %320 = vmatpush1.msra.mxu0 0.0
  %321 = vmatprep.subr.mxu0 0.0
  %322 = vmatpush1.msra.mxu0 0.0
  %323 = vmatprep.subr.mxu0 0.0
  %324 = vmatpush1.msra.mxu0 0.0
  %325 = vmatprep.subr.mxu0 0.0
  %326 = vmatpush1.msra.mxu0 0.0
  %327 = vmatprep.subr.mxu0 0.0
  %328 = vmatpush1.msra.mxu0 0.0
  %329 = vmatprep.subr.mxu0 0.0
  %330 = vmatpush1.msra.mxu0 0.0
  %331 = vmatprep.subr.mxu0 0.0
  %332 = vmatpush1.msra.mxu0 0.0
  %333 = vmatprep.subr.mxu0 0.0
  %334 = vmatpush1.msra.mxu0 0.0
  %335 = vmatprep.subr.mxu0 0.0
  %336 = vmatpush1.msra.mxu0 0.0
  %337 = vmatprep.subr.mxu0 0.0
  %338 = vmatpush1.msra.mxu0 0.0
  %339 = vmatprep.subr.mxu0 0.0
  %340 = vmatpush1.msra.mxu0 0.0
  %341 = vmatprep.subr.mxu0 0.0
  %342 = vmatpush1.msra.mxu0 0.0
  %343 = vmatprep.subr.mxu0 0.0
  %344 = vmatpush1.msra.mxu0 0.0
  %345 = vmatprep.subr.mxu0 0.0
  %346 = vmatpush1.msra.mxu0 0.0
  %347 = vmatprep.mubr.f32.mxu0 0.0
  %348 = vmatmul.mubr.f32.gmra.mrb[0].mxu0 %v259
  %v349 = vpop.f32.mrb[0].mxu0
  %v350 = vadd.f32 %v281, %v349
  %v351 = vpop.f32.mrb[0].mxu0
  %352 = vdwg.mxu0
  %v353 = vmax.f32 %v350, 0.0
  %v354 = vld [vmem:[%s7] sm:$0xff]
  %v355 = vld [vmem:[%s7 + $0x8] sm:$0xff]
  %v356 = vld [vmem:[%s7 + $0x10] sm:$0xff]
  %v357 = vld [vmem:[%s7 + $0x18] sm:$0xff]
  %v358 = vld [vmem:[%s7 + $0x20] sm:$0xff]
  %v359 = vld [vmem:[%s7 + $0x28] sm:$0xff]
  %v360 = vld [vmem:[%s7 + $0x30] sm:$0xff]
  %v361 = vld [vmem:[%s7 + $0x38] sm:$0xff]
  %v362 = vld [vmem:[%s8] sm:$0x1]
  %v364 = vlaneseq
  %v365 = vshrl.u32 %v364, 7
  %v366 = vsub.s32 0, %v365
  %v367 = vrot.slane %v362, %v366
  %vm369 = vcmask 523264
  %v371 = vsel %vm369, %v353, 0
  %373 = vmatprep.subr.mxu0 0.0
  %374 = vmatpush1.msra.mxu0 %v354
  %375 = vmatprep.subr.mxu0 0.0
  %376 = vmatpush1.msra.mxu0 %v355
  %377 = vmatprep.subr.mxu0 0.0
  %378 = vmatpush1.msra.mxu0 %v356
  %379 = vmatprep.subr.mxu0 0.0
  %380 = vmatpush1.msra.mxu0 %v357
  %381 = vmatprep.subr.mxu0 0.0
  %382 = vmatpush1.msra.mxu0 %v358
  %383 = vmatprep.subr.mxu0 0.0
  %384 = vmatpush1.msra.mxu0 %v359
  %385 = vmatprep.subr.mxu0 0.0
  %386 = vmatpush1.msra.mxu0 %v360
  %387 = vmatprep.subr.mxu0 0.0
  %388 = vmatpush1.msra.mxu0 %v361
  %389 = vmatprep.subr.mxu0 0.0
  %390 = vmatpush1.msra.mxu0 0.0
  %391 = vmatprep.subr.mxu0 0.0
  %392 = vmatpush1.msra.mxu0 0.0
  %393 = vmatprep.subr.mxu0 0.0
  %394 = vmatpush1.msra.mxu0 0.0
  %395 = vmatprep.subr.mxu0 0.0
  %396 = vmatpush1.msra.mxu0 0.0
  %397 = vmatprep.subr.mxu0 0.0
  %398 = vmatpush1.msra.mxu0 0.0
  %399 = vmatprep.subr.mxu0 0.0
  %400 = vmatpush1.msra.mxu0 0.0
  %401 = vmatprep.subr.mxu0 0.0
  %402 = vmatpush1.msra.mxu0 0.0
  %403 = vmatprep.subr.mxu0 0.0
  %404 = vmatpush1.msra.mxu0 0.0
  %405 = vmatprep.subr.mxu0 0.0
  %406 = vmatpush1.msra.mxu0 0.0
  %407 = vmatprep.subr.mxu0 0.0
  %408 = vmatpush1.msra.mxu0 0.0
  %409 = vmatprep.subr.mxu0 0.0
  %410 = vmatpush1.msra.mxu0 0.0
  %411 = vmatprep.subr.mxu0 0.0
  %412 = vmatpush1.msra.mxu0 0.0
  %413 = vmatprep.subr.mxu0 0.0
  %414 = vmatpush1.msra.mxu0 0.0
  %415 = vmatprep.subr.mxu0 0.0
  %416 = vmatpush1.msra.mxu0 0.0
  %417 = vmatprep.subr.mxu0 0.0
  %418 = vmatpush1.msra.mxu0 0.0
  %419 = vmatprep.subr.mxu0 0.0
  %420 = vmatpush1.msra.mxu0 0.0
  %421 = vmatprep.subr.mxu0 0.0
  %422 = vmatpush1.msra.mxu0 0.0
  %423 = vmatprep.subr.mxu0 0.0
  %424 = vmatpush1.msra.mxu0 0.0
  %425 = vmatprep.subr.mxu0 0.0
  %426 = vmatpush1.msra.mxu0 0.0
  %427 = vmatprep.subr.mxu0 0.0
  %428 = vmatpush1.msra.mxu0 0.0
  %429 = vmatprep.subr.mxu0 0.0
  %430 = vmatpush1.msra.mxu0 0.0
  %431 = vmatprep.subr.mxu0 0.0
  %432 = vmatpush1.msra.mxu0 0.0
  %433 = vmatprep.subr.mxu0 0.0
  %434 = vmatpush1.msra.mxu0 0.0
  %435 = vmatprep.subr.mxu0 0.0
  %436 = vmatpush1.msra.mxu0 0.0
  %437 = vmatprep.mubr.f32.mxu0 0.0
  %438 = vmatmul.mubr.f32.gmra.mrb[0].mxu0 %v371
  %v439 = vpop.f32.mrb[0].mxu0
  %v440 = vadd.f32 %v367, %v439
  %v441 = vpop.f32.mrb[0].mxu0
  %442 = vdwg.mxu0
  %v443 = vsub.f32 0.0, %v440
  %v444 = vmul.f32 %v443, 1.442695
  %v445 = vpow.pop %v444
  %v446 = vadd.f32 %v445, 1.0
  %v447 = vrcp.pop %v446
  %v448 = vmul.f32 1.0, %v447
  %vm449 = vcmask 64512
  %450 = vst.msk [vmem:[%s9] sm:$0xff] %vm449, %v448
  // Predicated region
  $region38: #{price_prediction_forward.1} parent=0 // pred_check
    _
  $region39: #{price_prediction_forward.1} parent=0 // pred_check_branch
    %452 = sbr.rel (0) target = $region41
  $region40: #{price_prediction_forward.1} parent=0 // pred_region
    _
  $region41: #{price_prediction_forward.1} parent=0 // pred_fallthru
    _
  // Predicated region
  $region42: #{price_prediction_forward.1} parent=0 // pred_check
    _
  $region43: #{price_prediction_forward.1} parent=0 // pred_check_branch
    %454 = sbr.rel (0) target = $region45
  $region44: #{price_prediction_forward.1} parent=0 // pred_region
    _
  $region45: #{price_prediction_forward.1} parent=0 // pred_fallthru
    _

</llo_original>
